<compile_context>
chip_gen: v6e
topology: v6e:2x2x1
jax: 0.10.0
libtpu: 0.0.40
codegen_flags: <defaults>
</compile_context>

<pallas_src>
import functools

import jax
import jax.numpy as jnp
from jax.experimental import pallas as pl
from jax.experimental.pallas import tpu as pltpu


_LANE = 128
_SUBLANE = 8

# Working-set budget (bytes) for the double-buffered in/out tiles plus f32
# temporaries.  Chosen to fit comfortably inside v7x's 64 MiB VMEM per
# TensorCore as well as v5e/v6e's 128 MiB.
_VMEM_TILE_BUDGET = 32 * 1024 * 1024
_VMEM_LIMIT_BYTES = 48 * 1024 * 1024   # scoped VMEM limit (headroom included)
_MAX_FEAT_TILE = 2048                  # keep several grid steps for pipelining


def _round_down_to(v, m):
    return (v // m) * m


def _round_up_to(v, m):
    return ((v + m - 1) // m) * m


# ----------------------------------------------------------------------------
# Single-pass kernel: whole batch (N rows) x one feature tile resident in VMEM.
# ----------------------------------------------------------------------------
def _bn_fullbatch_kernel(x_ref, o_ref, *, eps):
    # Upcast so sum-of-squares accumulates in f32 even for bf16 inputs
    # (free: the kernel is mem-bound, VPU/EUP have slack).
    x = x_ref[...].astype(jnp.float32)                    # (N, TD)
    u = jnp.sum(x * x, axis=0, keepdims=True) + eps       # (1, TD) f32
    o_ref[...] = (x * jax.lax.rsqrt(u)).astype(o_ref.dtype)


def _bn_single_pass(x, eps, feat_tile):
    n, d = x.shape
    grid = (pl.cdiv(d, feat_tile),)
    # NOTE: pipeline_mode=pl.Buffered(3) is a possible small extra win here;
    # left at the default (2) to keep the v7x VMEM budget safe.
    return pl.pallas_call(
        functools.partial(_bn_fullbatch_kernel, eps=eps),
        out_shape=jax.ShapeDtypeStruct((n, d), x.dtype),
        grid_spec=pltpu.PrefetchScalarGridSpec(
            num_scalar_prefetch=0,
            grid=grid,
            in_specs=[pl.BlockSpec((n, feat_tile), lambda j: (0, j))],
            out_specs=pl.BlockSpec((n, feat_tile), lambda j: (0, j)),
        ),
        compiler_params=pltpu.CompilerParams(
            dimension_semantics=("parallel",),       # shards feature axis over v7x's 2 TCs
            vmem_limit_bytes=_VMEM_LIMIT_BYTES,
        ),
    )(x)


def _choose_feat_tile(n, d, itemsize):
    """Largest lane-multiple feature tile whose full-batch slab fits the VMEM budget.

    Returns None if even a 128-wide column slab does not fit (-> two-pass path).
    Per feature column we hold: in + out blocks, double-buffered (4 * itemsize)
    plus ~2 f32 temporaries inside the kernel (8 bytes).
    """
    bytes_per_col = n * (4 * itemsize + 8)
    td_max = _round_down_to(_VMEM_TILE_BUDGET // max(bytes_per_col, 1), _LANE)
    if td_max < _LANE:
        return None
    td = min(td_max, _MAX_FEAT_TILE)
    if td >= d:
        total_bytes = n * d * itemsize
        if total_bytes >= (1 << 20) and d > _LANE:
            # Enough work to be worth pipelining and sharding across the two
            # v7x TensorCores: target ~4 feature-grid steps.
            td = max(_LANE, _round_up_to(pl.cdiv(d, 4), _LANE))
        else:
            # Tiny problem: one full-array block, no per-step grid overhead.
            td = d
    return td


# ----------------------------------------------------------------------------
# Two-pass path for large N (column slab does not fit VMEM).
# ----------------------------------------------------------------------------
def _colsumsq_kernel(x_ref, ssq_ref, *, n_total, batch_tile, needs_mask):
    i = pl.program_id(1)                                   # batch (reduction) axis

    @pl.when(i == 0)
    def _():
        ssq_ref[...] = jnp.zeros_like(ssq_ref)

    x = x_ref[...].astype(jnp.float32)                     # (TN, TD)
    if needs_mask:
        # Mask out padded (out-of-bounds) rows of the last batch block so the
        # stale VMEM contents don't pollute the reduction.
        row = i * batch_tile + jax.lax.broadcasted_iota(jnp.int32, x.shape, 0)
        x = jnp.where(row < n_total, x, 0.0)
    ssq_ref[...] += jnp.sum(x * x, axis=0, keepdims=True)  # f32 accumulate


def _normalize_kernel(x_ref, ssq_ref, o_ref, *, eps):
    x = x_ref[...].astype(jnp.float32)
    inv = jax.lax.rsqrt(ssq_ref[...] + eps)                # (1, TD)
    o_ref[...] = (x * inv).astype(o_ref.dtype)


def _bn_two_pass(x, eps, feat_tile=None, batch_tile=None):
    n, d = x.shape
    itemsize = jnp.dtype(x.dtype).itemsize

    td = feat_tile
    if td is None:
        td = d if d <= _LANE else min(512, _round_down_to(d, _LANE))
    tn = batch_tile
    if tn is None:
        # in + out blocks double-buffered + f32 temporaries per row of a tile.
        bytes_per_row = td * (4 * itemsize + 8)
        tn = _round_down_to(_VMEM_TILE_BUDGET // max(bytes_per_row, 1), 64)
        tn = max(64, min(tn, _round_up_to(n, _SUBLANE)))

    nd = pl.cdiv(d, td)
    nn = pl.cdiv(n, tn)

    # Pass 1: per-column sum of squares, accumulated in f32 over the batch axis.
    ssq = pl.pallas_call(
        functools.partial(_colsumsq_kernel, n_total=n, batch_tile=tn,
                          needs_mask=(n % tn != 0)),
        out_shape=jax.ShapeDtypeStruct((1, d), jnp.float32),
        grid_spec=pltpu.PrefetchScalarGridSpec(
            num_scalar_prefetch=0,
            grid=(nd, nn),                                 # reduction axis last
            in_specs=[pl.BlockSpec((tn, td), lambda j, i: (i, j))],
            out_specs=pl.BlockSpec((1, td), lambda j, i: (0, j)),
        ),
        compiler_params=pltpu.CompilerParams(
            dimension_semantics=("parallel", "arbitrary"),
            vmem_limit_bytes=_VMEM_LIMIT_BYTES,
        ),
    )(x)

    # Pass 2: normalize every column (fully parallel grid).
    return pl.pallas_call(
        functools.partial(_normalize_kernel, eps=eps),
        out_shape=jax.ShapeDtypeStruct((n, d), x.dtype),
        grid_spec=pltpu.PrefetchScalarGridSpec(
            num_scalar_prefetch=0,
            grid=(nd, nn),
            in_specs=[pl.BlockSpec((tn, td), lambda j, i: (i, j)),
                      pl.BlockSpec((1, td), lambda j, i: (0, j))],
            out_specs=pl.BlockSpec((tn, td), lambda j, i: (i, j)),
        ),
        compiler_params=pltpu.CompilerParams(
            dimension_semantics=("parallel", "parallel"),
            vmem_limit_bytes=_VMEM_LIMIT_BYTES,
        ),
    )(x, ssq)


# ----------------------------------------------------------------------------
# Public entry point.
# ----------------------------------------------------------------------------
def bn_forward(x, eps: float = 1e-6, *, force_two_pass: bool = False,
               feat_tile: int = None, batch_tile: int = None):
    """Pallas TPU implementation of the custom BN forward (out = x @ diag(u)^-1/2)."""
    n, d = x.shape
    itemsize = jnp.dtype(x.dtype).itemsize
    if not force_two_pass:
        td = feat_tile if feat_tile is not None else _choose_feat_tile(n, d, itemsize)
        if td is not None:
            return _bn_single_pass(x, eps, td)
    return _bn_two_pass(x, eps, feat_tile=feat_tile, batch_tile=batch_tile)


def bn_reference(x, eps: float = 1e-6):
    """Pure-JAX reference mirroring the PyTorch module exactly."""
    u = jnp.diag(x.T @ x).reshape(-1, 1) + eps             # (D, 1)
    diag = jnp.eye(x.shape[1], dtype=x.dtype) * jnp.power(u, -0.5)
    return x @ diag.T


if __name__ == "__main__":
    key = jax.random.PRNGKey(0)
    k1, k2 = jax.random.split(key)

    # Small shape consistent with the module: x is (batch, input_dim).
    batch, input_dim = 8, 256
    x = jax.random.normal(k1, (batch, input_dim), dtype=jnp.float32)
    out = jax.block_until_ready(bn_forward(x))
    ref = bn_reference(x)
    assert out.shape == (batch, input_dim)
    assert jnp.allclose(out, ref, atol=1e-5, rtol=1e-5), "single-pass mismatch"

    # Exercise the large-N two-pass path (incl. tail blocks on both axes) at a
    # small, fast shape by forcing small tiles.
    batch2, input_dim2 = 1000, 320
    x2 = jax.random.normal(k2, (batch2, input_dim2), dtype=jnp.float32)
    out2 = jax.block_until_ready(
        bn_forward(x2, force_two_pass=True, feat_tile=128, batch_tile=256))
    ref2 = bn_reference(x2)
    assert out2.shape == (batch2, input_dim2)
    assert jnp.allclose(out2, ref2, atol=1e-5, rtol=1e-5), "two-pass mismatch"

    print("KERNEL_OK")
</pallas_src>

<mosaic_0001>
module attributes {stable_mosaic.version = 11 : i64} {
  func.func @_bn_fullbatch_kernel(%arg0: i32, %arg1: memref<8x256xf32, #tpu.memory_space<vmem>>, %arg2: memref<8x256xf32, #tpu.memory_space<vmem>>) attributes {dimension_semantics = [#tpu.dimension_semantics<parallel>], iteration_bounds = array<i64: 1>, scalar_prefetch = 0 : i64, scratch_operands = 0 : i64, tpu.core_type = #tpu.core_type<tc>, window_params = [{transform_indices = @transform_0, window_bounds = array<i64: 8, 256>}, {transform_indices = @transform_1, window_bounds = array<i64: 8, 256>}]} {
    %c0 = arith.constant 0 : index
    %c0_0 = arith.constant 0 : index
    %0 = vector.load %arg1[%c0, %c0_0] : memref<8x256xf32, #tpu.memory_space<vmem>>, vector<8x256xf32>
    %1 = arith.mulf %0, %0 : vector<8x256xf32>
    %cst = arith.constant dense<0.000000e+00> : vector<256xf32>
    %2 = vector.multi_reduction <add>, %1, %cst [0] : vector<8x256xf32> to vector<256xf32>
    %3 = vector.shape_cast %2 : vector<256xf32> to vector<1x256xf32>
    %cst_1 = arith.constant 9.99999997E-7 : f32
    %4 = vector.broadcast %cst_1 : f32 to vector<1x256xf32>
    %5 = arith.addf %3, %4 : vector<1x256xf32>
    %6 = math.rsqrt %5 : vector<1x256xf32>
    %7 = vector.broadcast %6 : vector<1x256xf32> to vector<8x256xf32>
    %8 = arith.mulf %0, %7 : vector<8x256xf32>
    %c0_2 = arith.constant 0 : index
    %c0_3 = arith.constant 0 : index
    %9 = vector.load %arg2[%c0_2, %c0_3] : memref<8x256xf32, #tpu.memory_space<vmem>>, vector<8x256xf32>
    tpu.vector_store %arg2[%c0_2, %c0_3], %8 {strides = array<i32>} : memref<8x256xf32, #tpu.memory_space<vmem>>, vector<8x256xf32>,
    return
  }
  func.func @transform_0(%arg0: i32) -> (i32, i32) {
    %c0_i32 = arith.constant 0 : i32
    %c0_i32_0 = arith.constant 0 : i32
    return %c0_i32, %arg0 : i32, i32
  }
  func.func @transform_1(%arg0: i32) -> (i32, i32) {
    %c0_i32 = arith.constant 0 : i32
    %c0_i32_0 = arith.constant 0 : i32
    return %c0_i32, %arg0 : i32, i32
  }
}

</mosaic_0001>

<llo_original>
// kernel: tpu_custom_call.1
$region0: #{tpu_custom_call.1}
  #allocation0 [shape = 'u32[]', space=smem, size = 0x4, offset = 0x4, fixed_abs, tag = 'smem constant byte address 0x4 - core index']
  #allocation1 [shape = 'u32[144,128]{1,0:T(1,128)}', space=vmem, size = 0x12000, scoped, tag = 'internal scratch']
  %s0 = inlined_call_operand.hbm [shape: f32[8,256], index: 0, kind: input, shape index: {}]
  %s1 = inlined_call_operand.hbm [shape: f32[8,256], index: 1, kind: output, shape index: {}]
  %s2 = sld [smem:[#allocation0]]
  $region18: #{tpu_custom_call.1} parent=0
    _
  %s4 = ssub.s32 1, %s2
  %s5 = scalar_select 0, %s4, %s2
  $region1: #{tpu_custom_call.1} parent=0
    #allocation2 [shape = 'u8[8192]{0}', space=vmem, size = 0x2000, scoped, tag = 'input window, operand 0, single buffered']
    #allocation3 [shape = 's32[1]{0}', space=sflag, size = 0x4, scoped, tag = 'scoped memory for tpu_custom_call.1']
    #allocation4 [shape = 's32[1]{0}', space=sflag, size = 0x4, scoped, tag = 'scoped memory for tpu_custom_call.1']
    #allocation5 [shape = 'u8[8192]{0}', space=vmem, size = 0x2000, scoped, tag = 'output window, operand 0, single buffered']
    %6 = vsyncpa [#allocation3], 0
    %7 = vsyncpa [#allocation4], 0
    // Predicated region
    $region2: #{tpu_custom_call.1} parent=1 // pred_check
      _
    $region3: #{tpu_custom_call.1} parent=1 // pred_check_branch
      %9 = sbr.rel (0) target = $region5
    $region4: #{tpu_custom_call.1} parent=1 // pred_region
      %s11 = ssub.s32 256, 256
      %12 = vsyncadd [#allocation3], %s11
      %s14 = sshll.u32 [#allocation2], 4
      %s15 = int_to_ptr.vmem [resolvable:$true] %s14
      %17 = dma.hbm_to_vmem [thread:$0]  %s0, 256, %s15, [#allocation3]
    $region5: #{tpu_custom_call.1} parent=1 // pred_fallthru
      _
    // Predicated region
    $region6: #{tpu_custom_call.1} parent=1 // pred_check
      _
    $region7: #{tpu_custom_call.1} parent=1 // pred_check_branch
      %19 = sbr.rel (0) target = $region9
    $region8: #{tpu_custom_call.1} parent=1 // pred_region
      %20 = dma.done [#allocation3], 256
    $region9: #{tpu_custom_call.1} parent=1 // pred_fallthru
      _
    %v21 = vld [vmem:[#allocation2] sm:$0xff]
    %v22 = vld [vmem:[#allocation2 + $0x8] sm:$0xff]
    %v23 = vmul.f32 %v21, %v21
    %v24 = vmul.f32 %v22, %v22
    %v25 = vrot.slane %v23, 4
    %v26 = vadd.f32 %v23, %v25
    %v27 = vrot.slane %v26, 2
    %v28 = vadd.f32 %v26, %v27
    %v29 = vrot.slane %v28, 1
    %v30 = vadd.f32 %v28, %v29
    %v31 = vrot.slane %v24, 4
    %v32 = vadd.f32 %v24, %v31
    %v33 = vrot.slane %v32, 2
    %v34 = vadd.f32 %v32, %v33
    %v35 = vrot.slane %v34, 1
    %v36 = vadd.f32 %v34, %v35
    %v37 = vadd.f32 %v30, 1e-06
    %v38 = vadd.f32 %v36, 1e-06
    %v39 = vrsqrt.pop %v37
    %v40 = vrsqrt.pop %v38
    %v41 = vmul.f32 %v21, %v39
    %v42 = vmul.f32 %v22, %v40
    %43 = vst [vmem:[#allocation5] sm:$0xff] %v41
    %44 = vst [vmem:[#allocation5 + $0x8] sm:$0xff] %v42
    // Predicated region
    $region10: #{tpu_custom_call.1} parent=1 // pred_check
      _
    $region11: #{tpu_custom_call.1} parent=1 // pred_check_branch
      %46 = sbr.rel (0) target = $region13
    $region12: #{tpu_custom_call.1} parent=1 // pred_region
      %s48 = ssub.s32 256, 256
      %49 = vsyncadd [#allocation4], %s48
      %s51 = sshll.u32 [#allocation5], 4
      %s52 = int_to_ptr.vmem [resolvable:$true] %s51
      %54 = dma.vmem_to_hbm [thread:$0]  %s52, 256, %s1, [#allocation4]
    $region13: #{tpu_custom_call.1} parent=1 // pred_fallthru
      _
    // Predicated region
    $region14: #{tpu_custom_call.1} parent=1 // pred_check
      _
    $region15: #{tpu_custom_call.1} parent=1 // pred_check_branch
      %56 = sbr.rel (0) target = $region17
    $region16: #{tpu_custom_call.1} parent=1 // pred_region
      %57 = dma.done [#allocation4], 256
    $region17: #{tpu_custom_call.1} parent=1 // pred_fallthru
      _
    %58 = vsyncpa [#allocation3], 1
    %59 = vsyncpa [#allocation4], 1

</llo_original>
